<compile_context>
chip_gen: v7x
topology: tpu7x:2x2x1
jax: 0.10.0
libtpu: 0.0.40
codegen_flags: <defaults>
</compile_context>

<pallas_src>
import jax
import jax.numpy as jnp
from jax.experimental import pallas as pl
from jax.experimental.pallas import tpu as pltpu


_VMEM_LIMIT = 48 * 1024 * 1024   # above 16 MiB (v5e) / 32 MiB (v6e,v7x) scoped defaults


def _round_up(x, m):
    return (x + m - 1) // m * m


# ---------------------------------------------------------------------------
# Kernel A: Bahdanau attention + single-step GRU (grid over batch tiles only).
# Emits h_new and the fused projection feature cat(emb, weighted, h_new).
# ---------------------------------------------------------------------------
def _attn_gru_kernel(emb_ref, h_ref, enc_ref,
                     attn_wh_ref, attn_we_ref, attn_b_ref, v_ref,
                     w_ih_ref, w_hh_ref, b_ih_ref, b_hh_ref,
                     feat_ref, h_out_ref):
    f32 = jnp.float32
    emb = emb_ref[...]                       # [bt, E]
    h = h_ref[...]                           # [bt, H]
    enc = enc_ref[...]                       # [bt, S, H]
    bt, s, hd = enc.shape

    # ---- Bahdanau attention, softmax over the source-length (lane-local) axis ----
    enc_proj = jnp.dot(enc.reshape(bt * s, hd), attn_we_ref[...],
                       preferred_element_type=f32).reshape(bt, s, hd)    # [bt,S,H]
    h_proj = jnp.dot(h, attn_wh_ref[...], preferred_element_type=f32)    # [bt,H] (once)
    energy = jnp.tanh(enc_proj + h_proj[:, None, :] + attn_b_ref[...])   # [bt,S,H]

    # M=1 contractions on VPU multiply + reduce (keep the MXU pipeline clean)
    scores = jnp.sum(energy * v_ref[...], axis=-1)                       # [bt,S]
    scores = scores - jnp.max(scores, axis=-1, keepdims=True)
    p = jnp.exp(scores)
    a = p / jnp.sum(p, axis=-1, keepdims=True)                           # [bt,S]
    weighted = jnp.sum(a[:, :, None] * enc, axis=1)                      # [bt,H]

    # ---- fused single-step GRU cell (PyTorch gate order r, z, n) ----
    x = jnp.concatenate([weighted, emb], axis=1)                         # [bt,H+E]
    gi = jnp.dot(x, w_ih_ref[...], preferred_element_type=f32) + b_ih_ref[...]
    gh = jnp.dot(h, w_hh_ref[...], preferred_element_type=f32) + b_hh_ref[...]
    r = jax.nn.sigmoid(gi[:, :hd] + gh[:, :hd])
    z = jax.nn.sigmoid(gi[:, hd:2 * hd] + gh[:, hd:2 * hd])
    n = jnp.tanh(gi[:, 2 * hd:] + r * gh[:, 2 * hd:])
    h_new = (1.0 - z) * n + z * h                                        # [bt,H]

    h_out_ref[...] = h_new
    # one-time concat per batch tile, amortized over every vocab tile of kernel B
    feat_ref[...] = jnp.concatenate([emb, weighted, h_new],
                                    axis=1).astype(feat_ref.dtype)


# ---------------------------------------------------------------------------
# Kernel B: vocab projection — a single K=E+2H GEMM per (batch, vocab) tile.
# ---------------------------------------------------------------------------
def _proj_kernel(feat_ref, w_ref, b_ref, pred_ref):
    pred_ref[...] = (jnp.dot(feat_ref[...], w_ref[...],
                             preferred_element_type=jnp.float32)
                     + b_ref[...]).astype(pred_ref.dtype)


def decoder_with_attention(params, input_tokens, hidden, encoder_outputs,
                           *, batch_tile=None, vocab_tile=1024,
                           proj_dtype=jnp.bfloat16):
    """Pallas forward.

    input_tokens: [B] int32, hidden: [B, H] f32, encoder_outputs: [S, B, H] f32.
    Returns (prediction [1, B, V] f32, new_hidden [B, H] f32) — same as the torch module.
    proj_dtype controls the streaming dtype of W_out / the fused feature (bf16 default).
    """
    B = input_tokens.shape[0]
    S, _, H = encoder_outputs.shape
    V, E = params["emb_table"].shape
    K = E + 2 * H

    # ---- glue: embedding gather (dropout == identity in eval mode) ----
    embedded = params["emb_table"][input_tokens].astype(jnp.float32)          # [B, E]
    enc_bsh = jnp.transpose(encoder_outputs, (1, 0, 2)).astype(jnp.float32)   # [B, S, H]
    hidden_in = hidden.astype(jnp.float32)

    # ---- batch tiling: prefer nb == 1 so W_out streams from HBM exactly once ----
    bt = batch_tile or min(256, _round_up(B, 8))
    B_pad = _round_up(B, bt)
    if B_pad != B:
        pad = B_pad - B
        embedded = jnp.pad(embedded, ((0, pad), (0, 0)))
        hidden_in = jnp.pad(hidden_in, ((0, pad), (0, 0)))
        enc_bsh = jnp.pad(enc_bsh, ((0, pad), (0, 0), (0, 0)))
    nb = B_pad // bt

    # ---- attention weight split by cat(hidden, enc_out) rows; GRU weights gate-fused ----
    attn_Wh = params["attn_W"][:H].astype(jnp.float32)
    attn_We = params["attn_W"][H:].astype(jnp.float32)
    attn_b = params["attn_b"].reshape(1, H).astype(jnp.float32)
    v_row = params["v_w"].reshape(1, H).astype(jnp.float32)
    W_ih = params["W_ih"].astype(jnp.float32)           # [H+E, 3H], rows = cat(weighted, emb)
    W_hh = params["W_hh"].astype(jnp.float32)
    b_ih = params["b_ih"].reshape(1, -1).astype(jnp.float32)
    b_hh = params["b_hh"].reshape(1, -1).astype(jnp.float32)

    def full_block(arr):     # grid-invariant full-array block (weights / biases), 1-D grid
        nd = arr.ndim
        return pl.BlockSpec(arr.shape, lambda i, _n=nd: (0,) * _n)

    # -------------------- kernel A: attention + GRU --------------------
    feat, h_new_p = pl.pallas_call(
        _attn_gru_kernel,
        out_shape=(jax.ShapeDtypeStruct((B_pad, K), proj_dtype),
                   jax.ShapeDtypeStruct((B_pad, H), jnp.float32)),
        grid=(nb,),
        in_specs=[
            pl.BlockSpec((bt, E), lambda i: (i, 0)),          # embedded
            pl.BlockSpec((bt, H), lambda i: (i, 0)),          # hidden
            pl.BlockSpec((bt, S, H), lambda i: (i, 0, 0)),    # encoder outputs (batch-major)
            full_block(attn_Wh), full_block(attn_We),
            full_block(attn_b), full_block(v_row),
            full_block(W_ih), full_block(W_hh),
            full_block(b_ih), full_block(b_hh),
        ],
        out_specs=(pl.BlockSpec((bt, K), lambda i: (i, 0)),
                   pl.BlockSpec((bt, H), lambda i: (i, 0))),
        compiler_params=pltpu.CompilerParams(
            dimension_semantics=("parallel",),
            vmem_limit_bytes=_VMEM_LIMIT),
    )(embedded, hidden_in, enc_bsh,
      attn_Wh, attn_We, attn_b, v_row,
      W_ih, W_hh, b_ih, b_hh)

    # -------------------- kernel B: lane-dense vocab projection --------------------
    tv = min(vocab_tile, _round_up(V, 128))
    Vp = _round_up(V, tv)
    nv = Vp // tv
    W_out = jnp.pad(params["W_out"].astype(jnp.float32),
                    ((0, 0), (0, Vp - V))).astype(proj_dtype)        # [K, Vp], streamed dtype
    b_out = jnp.pad(params["b_out"].astype(jnp.float32),
                    (0, Vp - V)).reshape(1, Vp)

    pred_p = pl.pallas_call(
        _proj_kernel,
        out_shape=jax.ShapeDtypeStruct((B_pad, Vp), jnp.float32),
        grid=(nb, nv),
        in_specs=[
            pl.BlockSpec((bt, K), lambda i, j: (i, 0)),       # fused feature (tiny, reused)
            pl.BlockSpec((K, tv), lambda i, j: (0, j)),       # W_out column tile (dominant DMA)
            pl.BlockSpec((1, tv), lambda i, j: (0, j)),       # bias column tile
        ],
        out_specs=pl.BlockSpec((bt, tv), lambda i, j: (i, j)),
        compiler_params=pltpu.CompilerParams(
            dimension_semantics=("parallel", "parallel"),
            vmem_limit_bytes=_VMEM_LIMIT),
    )(feat, W_out, b_out)

    prediction = pred_p[:B, :V][None]     # [1, B, V]  (torch: out applied on [1,B,*])
    h_new = h_new_p[:B]                   # [B, H]
    return prediction, h_new


def reference_forward(params, input_tokens, hidden, encoder_outputs):
    """Pure-JAX reference mirroring the torch module semantics (f32 everywhere)."""
    H = hidden.shape[1]
    S = encoder_outputs.shape[0]
    embedded = params["emb_table"][input_tokens][None]               # [1, B, E]
    h_rep = jnp.broadcast_to(hidden[None], (S,) + hidden.shape)      # [S, B, H]
    energy = jnp.tanh(jnp.concatenate([h_rep, encoder_outputs], axis=2)
                      @ params["attn_W"] + params["attn_b"])
    scores = energy @ params["v_w"]                                  # [S, B, 1]
    a = jax.nn.softmax(scores, axis=0)
    weighted = jnp.sum(a * encoder_outputs, axis=0, keepdims=True)   # [1, B, H]
    x = jnp.concatenate([weighted, embedded], axis=2)[0]             # [B, H+E]
    gi = x @ params["W_ih"] + params["b_ih"]
    gh = hidden @ params["W_hh"] + params["b_hh"]
    r = jax.nn.sigmoid(gi[:, :H] + gh[:, :H])
    z = jax.nn.sigmoid(gi[:, H:2 * H] + gh[:, H:2 * H])
    n = jnp.tanh(gi[:, 2 * H:] + r * gh[:, 2 * H:])
    h_new = (1.0 - z) * n + z * hidden
    o_in = jnp.concatenate([embedded[0], weighted[0], h_new], axis=1)
    pred = o_in @ params["W_out"] + params["b_out"]
    return pred[None], h_new


if __name__ == "__main__":
    # output_dim V, emb_dim E, enc_hid = dec_hid = H, src_len S, batch B
    V, E, H, S, B = 64, 32, 32, 8, 2
    key = jax.random.PRNGKey(0)
    ks = jax.random.split(key, 12)
    scale = 0.1
    params = {
        "emb_table": scale * jax.random.normal(ks[0], (V, E), jnp.float32),
        "attn_W":    scale * jax.random.normal(ks[1], (2 * H, H), jnp.float32),
        "attn_b":    scale * jax.random.normal(ks[2], (H,), jnp.float32),
        "v_w":       scale * jax.random.normal(ks[3], (H, 1), jnp.float32),
        "W_ih":      scale * jax.random.normal(ks[4], (H + E, 3 * H), jnp.float32),
        "W_hh":      scale * jax.random.normal(ks[5], (H, 3 * H), jnp.float32),
        "b_ih":      scale * jax.random.normal(ks[6], (3 * H,), jnp.float32),
        "b_hh":      scale * jax.random.normal(ks[7], (3 * H,), jnp.float32),
        "W_out":     scale * jax.random.normal(ks[8], (2 * H + E, V), jnp.float32),
        "b_out":     scale * jax.random.normal(ks[9], (V,), jnp.float32),
    }
    input_tokens = jax.random.randint(ks[10], (B,), 0, V, jnp.int32)
    hidden = jax.random.normal(ks[11], (B, H), jnp.float32)
    encoder_outputs = jax.random.normal(jax.random.PRNGKey(1), (S, B, H), jnp.float32)

    run_f32 = jax.jit(lambda p, t, h, e: decoder_with_attention(
        p, t, h, e, proj_dtype=jnp.float32))
    run_bf16 = jax.jit(lambda p, t, h, e: decoder_with_attention(
        p, t, h, e, proj_dtype=jnp.bfloat16))

    ref_pred, ref_h = reference_forward(params, input_tokens, hidden, encoder_outputs)

    # exact-path check (f32 W_out streaming)
    pred, h_new = run_f32(params, input_tokens, hidden, encoder_outputs)
    jax.block_until_ready((pred, h_new))
    assert pred.shape == (1, B, V) and h_new.shape == (B, H)
    assert jnp.allclose(pred, ref_pred, atol=1e-4, rtol=1e-4), \
        float(jnp.max(jnp.abs(pred - ref_pred)))
    assert jnp.allclose(h_new, ref_h, atol=1e-4, rtol=1e-4), \
        float(jnp.max(jnp.abs(h_new - ref_h)))

    # perf-path check (bf16 W_out / feature streaming, f32 accumulation) — relaxed tolerance
    pred_b, h_new_b = run_bf16(params, input_tokens, hidden, encoder_outputs)
    jax.block_until_ready((pred_b, h_new_b))
    assert jnp.allclose(pred_b, ref_pred, atol=2e-2, rtol=2e-2), \
        float(jnp.max(jnp.abs(pred_b - ref_pred)))
    assert jnp.allclose(h_new_b, ref_h, atol=1e-4, rtol=1e-4), \
        float(jnp.max(jnp.abs(h_new_b - ref_h)))

    print("KERNEL_OK")
</pallas_src>

<mosaic_0001>
module attributes {stable_mosaic.version = 11 : i64} {
  func.func @_proj_kernel(%arg0: i32, %arg1: i32, %arg2: memref<8x96xf32, #tpu.memory_space<vmem>>, %arg3: memref<96x128xf32, #tpu.memory_space<vmem>>, %arg4: memref<1x128xf32, #tpu.memory_space<vmem>>, %arg5: memref<8x128xf32, #tpu.memory_space<vmem>>) attributes {dimension_semantics = [#tpu.dimension_semantics<parallel>, #tpu.dimension_semantics<parallel>], iteration_bounds = array<i64: 1, 1>, scalar_prefetch = 0 : i64, scratch_operands = 0 : i64, tpu.core_type = #tpu.core_type<tc>, window_params = [{transform_indices = @transform_0, window_bounds = array<i64: 8, 96>}, {transform_indices = @transform_1, window_bounds = array<i64: 96, 128>}, {transform_indices = @transform_2, window_bounds = array<i64: 1, 128>}, {transform_indices = @transform_3, window_bounds = array<i64: 8, 128>}]} {
    %c0 = arith.constant 0 : index
    %c0_0 = arith.constant 0 : index
    %0 = vector.load %arg2[%c0, %c0_0] : memref<8x96xf32, #tpu.memory_space<vmem>>, vector<8x96xf32>
    %c0_1 = arith.constant 0 : index
    %c0_2 = arith.constant 0 : index
    %1 = vector.load %arg3[%c0_1, %c0_2] : memref<96x128xf32, #tpu.memory_space<vmem>>, vector<96x128xf32>
    %cst = arith.constant dense<0.000000e+00> : vector<8x128xf32>
    %2 = tpu.matmul %0, %1, %cst {dimension_numbers = #tpu.dot_dimension_numbers<[1], [0], [0], [1], [0, 0, 1, 1], [], []>} : vector<8x96xf32>, vector<96x128xf32>, vector<8x128xf32> -> vector<8x128xf32>
    %c0_3 = arith.constant 0 : index
    %c0_4 = arith.constant 0 : index
    %3 = vector.load %arg4[%c0_3, %c0_4] : memref<1x128xf32, #tpu.memory_space<vmem>>, vector<1x128xf32>
    %4 = vector.broadcast %3 : vector<1x128xf32> to vector<8x128xf32>
    %5 = arith.addf %2, %4 : vector<8x128xf32>
    %c0_5 = arith.constant 0 : index
    %c0_6 = arith.constant 0 : index
    %6 = vector.load %arg5[%c0_5, %c0_6] : memref<8x128xf32, #tpu.memory_space<vmem>>, vector<8x128xf32>
    tpu.vector_store %arg5[%c0_5, %c0_6], %5 {strides = array<i32>} : memref<8x128xf32, #tpu.memory_space<vmem>>, vector<8x128xf32>,
    return
  }
  func.func @transform_0(%arg0: i32, %arg1: i32) -> (i32, i32) {
    %c0_i32 = arith.constant 0 : i32
    %c0_i32_0 = arith.constant 0 : i32
    return %arg0, %c0_i32 : i32, i32
  }
  func.func @transform_1(%arg0: i32, %arg1: i32) -> (i32, i32) {
    %c0_i32 = arith.constant 0 : i32
    %c0_i32_0 = arith.constant 0 : i32
    return %c0_i32, %arg1 : i32, i32
  }
  func.func @transform_2(%arg0: i32, %arg1: i32) -> (i32, i32) {
    %c0_i32 = arith.constant 0 : i32
    %c0_i32_0 = arith.constant 0 : i32
    return %c0_i32, %arg1 : i32, i32
  }
  func.func @transform_3(%arg0: i32, %arg1: i32) -> (i32, i32) {
    %c0_i32 = arith.constant 0 : i32
    return %arg0, %arg1 : i32, i32
  }
}

module attributes {stable_mosaic.version = 11 : i64} {
  func.func @_attn_gru_kernel(%arg0: i32, %arg1: memref<8x32xf32, #tpu.memory_space<vmem>>, %arg2: memref<8x32xf32, #tpu.memory_space<vmem>>, %arg3: memref<8x8x32xf32, #tpu.memory_space<vmem>>, %arg4: memref<32x32xf32, #tpu.memory_space<vmem>>, %arg5: memref<32x32xf32, #tpu.memory_space<vmem>>, %arg6: memref<1x32xf32, #tpu.memory_space<vmem>>, %arg7: memref<1x32xf32, #tpu.memory_space<vmem>>, %arg8: memref<64x96xf32, #tpu.memory_space<vmem>>, %arg9: memref<32x96xf32, #tpu.memory_space<vmem>>, %arg10: memref<1x96xf32, #tpu.memory_space<vmem>>, %arg11: memref<1x96xf32, #tpu.memory_space<vmem>>, %arg12: memref<8x96xf32, #tpu.memory_space<vmem>>, %arg13: memref<8x32xf32, #tpu.memory_space<vmem>>) attributes {dimension_semantics = [#tpu.dimension_semantics<parallel>], iteration_bounds = array<i64: 1>, scalar_prefetch = 0 : i64, scratch_operands = 0 : i64, tpu.core_type = #tpu.core_type<tc>, window_params = [{transform_indices = @transform_0, window_bounds = array<i64: 8, 32>}, {transform_indices = @transform_1, window_bounds = array<i64: 8, 32>}, {transform_indices = @transform_2, window_bounds = array<i64: 8, 8, 32>}, {pipeline_mode = #tpu.pipeline_mode<synchronous>, transform_indices = @transform_3, window_bounds = array<i64: 32, 32>}, {pipeline_mode = #tpu.pipeline_mode<synchronous>, transform_indices = @transform_4, window_bounds = array<i64: 32, 32>}, {pipeline_mode = #tpu.pipeline_mode<synchronous>, transform_indices = @transform_5, window_bounds = array<i64: 1, 32>}, {pipeline_mode = #tpu.pipeline_mode<synchronous>, transform_indices = @transform_6, window_bounds = array<i64: 1, 32>}, {pipeline_mode = #tpu.pipeline_mode<synchronous>, transform_indices = @transform_7, window_bounds = array<i64: 64, 96>}, {pipeline_mode = #tpu.pipeline_mode<synchronous>, transform_indices = @transform_8, window_bounds = array<i64: 32, 96>}, {pipeline_mode = #tpu.pipeline_mode<synchronous>, transform_indices = @transform_9, window_bounds = array<i64: 1, 96>}, {pipeline_mode = #tpu.pipeline_mode<synchronous>, transform_indices = @transform_10, window_bounds = array<i64: 1, 96>}, {transform_indices = @transform_11, window_bounds = array<i64: 8, 96>}, {transform_indices = @transform_12, window_bounds = array<i64: 8, 32>}]} {
    %c0 = arith.constant 0 : index
    %c0_0 = arith.constant 0 : index
    %0 = vector.load %arg1[%c0, %c0_0] : memref<8x32xf32, #tpu.memory_space<vmem>>, vector<8x32xf32>
    %c0_1 = arith.constant 0 : index
    %c0_2 = arith.constant 0 : index
    %1 = vector.load %arg2[%c0_1, %c0_2] : memref<8x32xf32, #tpu.memory_space<vmem>>, vector<8x32xf32>
    %c0_3 = arith.constant 0 : index
    %c0_4 = arith.constant 0 : index
    %c0_5 = arith.constant 0 : index
    %2 = vector.load %arg3[%c0_3, %c0_4, %c0_5] : memref<8x8x32xf32, #tpu.memory_space<vmem>>, vector<8x8x32xf32>
    %3 = vector.shape_cast %2 : vector<8x8x32xf32> to vector<64x32xf32>
    %c0_6 = arith.constant 0 : index
    %c0_7 = arith.constant 0 : index
    %4 = vector.load %arg5[%c0_6, %c0_7] : memref<32x32xf32, #tpu.memory_space<vmem>>, vector<32x32xf32>
    %cst = arith.constant dense<0.000000e+00> : vector<64x32xf32>
    %5 = tpu.matmul %3, %4, %cst {dimension_numbers = #tpu.dot_dimension_numbers<[1], [0], [0], [1], [0, 0, 1, 1], [], []>} : vector<64x32xf32>, vector<32x32xf32>, vector<64x32xf32> -> vector<64x32xf32>
    %6 = vector.shape_cast %5 : vector<64x32xf32> to vector<8x8x32xf32>
    %c0_8 = arith.constant 0 : index
    %c0_9 = arith.constant 0 : index
    %7 = vector.load %arg4[%c0_8, %c0_9] : memref<32x32xf32, #tpu.memory_space<vmem>>, vector<32x32xf32>
    %cst_10 = arith.constant dense<0.000000e+00> : vector<8x32xf32>
    %8 = tpu.matmul %1, %7, %cst_10 {dimension_numbers = #tpu.dot_dimension_numbers<[1], [0], [0], [1], [0, 0, 1, 1], [], []>} : vector<8x32xf32>, vector<32x32xf32>, vector<8x32xf32> -> vector<8x32xf32>
    %9 = vector.shape_cast %8 : vector<8x32xf32> to vector<8x1x32xf32>
    %10 = vector.broadcast %9 : vector<8x1x32xf32> to vector<8x8x32xf32>
    %11 = arith.addf %6, %10 : vector<8x8x32xf32>
    %c0_11 = arith.constant 0 : index
    %c0_12 = arith.constant 0 : index
    %12 = vector.load %arg6[%c0_11, %c0_12] : memref<1x32xf32, #tpu.memory_space<vmem>>, vector<1x32xf32>
    %13 = vector.shape_cast %12 : vector<1x32xf32> to vector<1x1x32xf32>
    %14 = vector.broadcast %13 : vector<1x1x32xf32> to vector<8x8x32xf32>
    %15 = arith.addf %11, %14 : vector<8x8x32xf32>
    %16 = math.tanh %15 : vector<8x8x32xf32>
    %c0_13 = arith.constant 0 : index
    %c0_14 = arith.constant 0 : index
    %17 = vector.load %arg7[%c0_13, %c0_14] : memref<1x32xf32, #tpu.memory_space<vmem>>, vector<1x32xf32>
    %18 = vector.shape_cast %17 : vector<1x32xf32> to vector<1x1x32xf32>
    %19 = vector.broadcast %18 : vector<1x1x32xf32> to vector<8x8x32xf32>
    %20 = arith.mulf %16, %19 : vector<8x8x32xf32>
    %cst_15 = arith.constant dense<0.000000e+00> : vector<8x8xf32>
    %21 = vector.multi_reduction <add>, %20, %cst_15 [2] : vector<8x8x32xf32> to vector<8x8xf32>
    %cst_16 = arith.constant dense<0xFF800000> : vector<8xf32>
    %22 = vector.multi_reduction <maximumf>, %21, %cst_16 [1] : vector<8x8xf32> to vector<8xf32>
    %23 = vector.shape_cast %22 : vector<8xf32> to vector<8x1xf32>
    %24 = vector.broadcast %23 : vector<8x1xf32> to vector<8x8xf32>
    %25 = arith.subf %21, %24 : vector<8x8xf32>
    %26 = math.exp %25 : vector<8x8xf32>
    %cst_17 = arith.constant dense<0.000000e+00> : vector<8xf32>
    %27 = vector.multi_reduction <add>, %26, %cst_17 [1] : vector<8x8xf32> to vector<8xf32>
    %28 = vector.shape_cast %27 : vector<8xf32> to vector<8x1xf32>
    %29 = vector.broadcast %28 : vector<8x1xf32> to vector<8x8xf32>
    %30 = arith.divf %26, %29 : vector<8x8xf32>
    %31 = vector.shape_cast %30 : vector<8x8xf32> to vector<8x8x1xf32>
    %32 = vector.broadcast %31 : vector<8x8x1xf32> to vector<8x8x32xf32>
    %33 = arith.mulf %32, %2 : vector<8x8x32xf32>
    %cst_18 = arith.constant dense<0.000000e+00> : vector<8x32xf32>
    %34 = vector.multi_reduction <add>, %33, %cst_18 [1] : vector<8x8x32xf32> to vector<8x32xf32>
    %35 = tpu.concatenate %34, %0 in 1 : vector<8x32xf32>, vector<8x32xf32> -> vector<8x64xf32>
    %c0_19 = arith.constant 0 : index
    %c0_20 = arith.constant 0 : index
    %36 = vector.load %arg8[%c0_19, %c0_20] : memref<64x96xf32, #tpu.memory_space<vmem>>, vector<64x96xf32>
    %cst_21 = arith.constant dense<0.000000e+00> : vector<8x96xf32>
    %37 = tpu.matmul %35, %36, %cst_21 {dimension_numbers = #tpu.dot_dimension_numbers<[1], [0], [0], [1], [0, 0, 1, 1], [], []>} : vector<8x64xf32>, vector<64x96xf32>, vector<8x96xf32> -> vector<8x96xf32>
    %c0_22 = arith.constant 0 : index
    %c0_23 = arith.constant 0 : index
    %38 = vector.load %arg10[%c0_22, %c0_23] : memref<1x96xf32, #tpu.memory_space<vmem>>, vector<1x96xf32>
    %39 = vector.broadcast %38 : vector<1x96xf32> to vector<8x96xf32>
    %40 = arith.addf %37, %39 : vector<8x96xf32>
    %c0_24 = arith.constant 0 : index
    %c0_25 = arith.constant 0 : index
    %41 = vector.load %arg9[%c0_24, %c0_25] : memref<32x96xf32, #tpu.memory_space<vmem>>, vector<32x96xf32>
    %cst_26 = arith.constant dense<0.000000e+00> : vector<8x96xf32>
    %42 = tpu.matmul %1, %41, %cst_26 {dimension_numbers = #tpu.dot_dimension_numbers<[1], [0], [0], [1], [0, 0, 1, 1], [], []>} : vector<8x32xf32>, vector<32x96xf32>, vector<8x96xf32> -> vector<8x96xf32>
    %c0_27 = arith.constant 0 : index
    %c0_28 = arith.constant 0 : index
    %43 = vector.load %arg11[%c0_27, %c0_28] : memref<1x96xf32, #tpu.memory_space<vmem>>, vector<1x96xf32>
    %44 = vector.broadcast %43 : vector<1x96xf32> to vector<8x96xf32>
    %45 = arith.addf %42, %44 : vector<8x96xf32>
    %46 = vector.extract_strided_slice %40 {offsets = [0, 0], sizes = [8, 32], strides = [1, 1]} : vector<8x96xf32> to vector<8x32xf32>
    %47 = vector.extract_strided_slice %45 {offsets = [0, 0], sizes = [8, 32], strides = [1, 1]} : vector<8x96xf32> to vector<8x32xf32>
    %48 = arith.addf %46, %47 : vector<8x32xf32>
    %49 = arith.negf %48 : vector<8x32xf32>
    %50 = math.exp %49 : vector<8x32xf32>
    %cst_29 = arith.constant 1.000000e+00 : f32
    %51 = vector.broadcast %cst_29 : f32 to vector<8x32xf32>
    %52 = arith.addf %51, %50 : vector<8x32xf32>
    %53 = arith.divf %51, %52 : vector<8x32xf32>
    %54 = vector.extract_strided_slice %40 {offsets = [0, 32], sizes = [8, 32], strides = [1, 1]} : vector<8x96xf32> to vector<8x32xf32>
    %55 = vector.extract_strided_slice %45 {offsets = [0, 32], sizes = [8, 32], strides = [1, 1]} : vector<8x96xf32> to vector<8x32xf32>
    %56 = arith.addf %54, %55 : vector<8x32xf32>
    %57 = arith.negf %56 : vector<8x32xf32>
    %58 = math.exp %57 : vector<8x32xf32>
    %cst_30 = arith.constant 1.000000e+00 : f32
    %59 = vector.broadcast %cst_30 : f32 to vector<8x32xf32>
    %60 = arith.addf %59, %58 : vector<8x32xf32>
    %61 = arith.divf %59, %60 : vector<8x32xf32>
    %62 = vector.extract_strided_slice %40 {offsets = [0, 64], sizes = [8, 32], strides = [1, 1]} : vector<8x96xf32> to vector<8x32xf32>
    %63 = vector.extract_strided_slice %45 {offsets = [0, 64], sizes = [8, 32], strides = [1, 1]} : vector<8x96xf32> to vector<8x32xf32>
    %64 = arith.mulf %53, %63 : vector<8x32xf32>
    %65 = arith.addf %62, %64 : vector<8x32xf32>
    %66 = math.tanh %65 : vector<8x32xf32>
    %cst_31 = arith.constant 1.000000e+00 : f32
    %67 = vector.broadcast %cst_31 : f32 to vector<8x32xf32>
    %68 = arith.subf %67, %61 : vector<8x32xf32>
    %69 = arith.mulf %68, %66 : vector<8x32xf32>
    %70 = arith.mulf %61, %1 : vector<8x32xf32>
    %71 = arith.addf %69, %70 : vector<8x32xf32>
    %c0_32 = arith.constant 0 : index
    %c0_33 = arith.constant 0 : index
    %72 = vector.load %arg13[%c0_32, %c0_33] : memref<8x32xf32, #tpu.memory_space<vmem>>, vector<8x32xf32>
    tpu.vector_store %arg13[%c0_32, %c0_33], %71 {strides = array<i32>} : memref<8x32xf32, #tpu.memory_space<vmem>>, vector<8x32xf32>,
    %73 = tpu.concatenate %0, %34, %71 in 1 : vector<8x32xf32>, vector<8x32xf32>, vector<8x32xf32> -> vector<8x96xf32>
    %c0_34 = arith.constant 0 : index
    %c0_35 = arith.constant 0 : index
    %74 = vector.load %arg12[%c0_34, %c0_35] : memref<8x96xf32, #tpu.memory_space<vmem>>, vector<8x96xf32>
    tpu.vector_store %arg12[%c0_34, %c0_35], %73 {strides = array<i32>} : memref<8x96xf32, #tpu.memory_space<vmem>>, vector<8x96xf32>,
    return
  }
  func.func @transform_0(%arg0: i32) -> (i32, i32) {
    %c0_i32 = arith.constant 0 : i32
    %c0_i32_0 = arith.constant 0 : i32
    return %arg0, %c0_i32 : i32, i32
  }
  func.func @transform_1(%arg0: i32) -> (i32, i32) {
    %c0_i32 = arith.constant 0 : i32
    %c0_i32_0 = arith.constant 0 : i32
    return %arg0, %c0_i32 : i32, i32
  }
  func.func @transform_2(%arg0: i32) -> (i32, i32, i32) {
    %c0_i32 = arith.constant 0 : i32
    %c0_i32_0 = arith.constant 0 : i32
    %c0_i32_1 = arith.constant 0 : i32
    return %arg0, %c0_i32, %c0_i32_0 : i32, i32, i32
  }
  func.func @transform_3(%arg0: i32) -> (i32, i32) {
    %c0_i32 = arith.constant 0 : i32
    %c0_i32_0 = arith.constant 0 : i32
    %c0_i32_1 = arith.constant 0 : i32
    return %c0_i32, %c0_i32_0 : i32, i32
  }
  func.func @transform_4(%arg0: i32) -> (i32, i32) {
    %c0_i32 = arith.constant 0 : i32
    %c0_i32_0 = arith.constant 0 : i32
    %c0_i32_1 = arith.constant 0 : i32
    return %c0_i32, %c0_i32_0 : i32, i32
  }
  func.func @transform_5(%arg0: i32) -> (i32, i32) {
    %c0_i32 = arith.constant 0 : i32
    %c0_i32_0 = arith.constant 0 : i32
    %c0_i32_1 = arith.constant 0 : i32
    return %c0_i32, %c0_i32_0 : i32, i32
  }
  func.func @transform_6(%arg0: i32) -> (i32, i32) {
    %c0_i32 = arith.constant 0 : i32
    %c0_i32_0 = arith.constant 0 : i32
    %c0_i32_1 = arith.constant 0 : i32
    return %c0_i32, %c0_i32_0 : i32, i32
  }
  func.func @transform_7(%arg0: i32) -> (i32, i32) {
    %c0_i32 = arith.constant 0 : i32
    %c0_i32_0 = arith.constant 0 : i32
    %c0_i32_1 = arith.constant 0 : i32
    return %c0_i32, %c0_i32_0 : i32, i32
  }
  func.func @transform_8(%arg0: i32) -> (i32, i32) {
    %c0_i32 = arith.constant 0 : i32
    %c0_i32_0 = arith.constant 0 : i32
    %c0_i32_1 = arith.constant 0 : i32
    return %c0_i32, %c0_i32_0 : i32, i32
  }
  func.func @transform_9(%arg0: i32) -> (i32, i32) {
    %c0_i32 = arith.constant 0 : i32
    %c0_i32_0 = arith.constant 0 : i32
    %c0_i32_1 = arith.constant 0 : i32
    return %c0_i32, %c0_i32_0 : i32, i32
  }
  func.func @transform_10(%arg0: i32) -> (i32, i32) {
    %c0_i32 = arith.constant 0 : i32
    %c0_i32_0 = arith.constant 0 : i32
    %c0_i32_1 = arith.constant 0 : i32
    return %c0_i32, %c0_i32_0 : i32, i32
  }
  func.func @transform_11(%arg0: i32) -> (i32, i32) {
    %c0_i32 = arith.constant 0 : i32
    %c0_i32_0 = arith.constant 0 : i32
    return %arg0, %c0_i32 : i32, i32
  }
  func.func @transform_12(%arg0: i32) -> (i32, i32) {
    %c0_i32 = arith.constant 0 : i32
    %c0_i32_0 = arith.constant 0 : i32
    return %arg0, %c0_i32 : i32, i32
  }
}

</mosaic_0001>

<llo_original>
// kernel: _lambda_.3
$region0: #{_lambda_.3}
  #allocation0 [shape = 'u32[]', space=smem, size = 0x4, offset = 0x4, fixed_abs, tag = 'smem constant byte address 0x4 - core index']
  #allocation1 [shape = 'u32[144,128]{1,0:T(1,128)}', space=vmem, size = 0x12000, scoped, tag = 'internal scratch']
  %s0 = inlined_call_operand.vmem [shape: f32[8,96], index: 0, kind: input, shape index: {}]
  %s1 = inlined_call_operand.vmem [shape: f32[96,128], index: 1, kind: input, shape index: {}]
  %s2 = inlined_call_operand.vmem [shape: f32[1,128], index: 2, kind: input, shape index: {}]
  %s3 = inlined_call_operand.vmem [shape: f32[8,128], index: 3, kind: output, shape index: {}]
  %s4 = sld [smem:[#allocation0]]
  $region22: #{_lambda_.3} parent=0
    _
  %s6 = ssub.s32 1, %s4
  %s7 = scalar_select 0, %s6, %s4
  // Predicated region
  $region2: #{_lambda_.3} parent=0 // pred_check
    _
  $region3: #{_lambda_.3} parent=0 // pred_check_branch
    %9 = sbr.rel (0) target = $region5
  $region4: #{_lambda_.3} parent=0 // pred_region
    _
  $region5: #{_lambda_.3} parent=0 // pred_fallthru
    _
  // Predicated region
  $region6: #{_lambda_.3} parent=0 // pred_check
    _
  $region7: #{_lambda_.3} parent=0 // pred_check_branch
    %11 = sbr.rel (0) target = $region9
  $region8: #{_lambda_.3} parent=0 // pred_region
    _
  $region9: #{_lambda_.3} parent=0 // pred_fallthru
    _
  // Predicated region
  $region10: #{_lambda_.3} parent=0 // pred_check
    _
  $region11: #{_lambda_.3} parent=0 // pred_check_branch
    %13 = sbr.rel (0) target = $region13
  $region12: #{_lambda_.3} parent=0 // pred_region
    _
  $region13: #{_lambda_.3} parent=0 // pred_fallthru
    _
  %v14 = vld [vmem:[%s0] sm:$0xff]
  %v15 = vld [vmem:[%s1] sm:$0xff]
  %v16 = vld [vmem:[%s1 + $0x8] sm:$0xff]
  %v17 = vld [vmem:[%s1 + $0x10] sm:$0xff]
  %v18 = vld [vmem:[%s1 + $0x18] sm:$0xff]
  %v19 = vld [vmem:[%s1 + $0x20] sm:$0xff]
  %v20 = vld [vmem:[%s1 + $0x28] sm:$0xff]
  %v21 = vld [vmem:[%s1 + $0x30] sm:$0xff]
  %v22 = vld [vmem:[%s1 + $0x38] sm:$0xff]
  %v23 = vld [vmem:[%s1 + $0x40] sm:$0xff]
  %v24 = vld [vmem:[%s1 + $0x48] sm:$0xff]
  %v25 = vld [vmem:[%s1 + $0x50] sm:$0xff]
  %v26 = vld [vmem:[%s1 + $0x58] sm:$0xff]
  %v27 = vld [vmem:[%s2] sm:$0x1]
  %v29 = vlaneseq
  %v30 = vshrl.u32 %v29, 7
  %v31 = vsub.s32 0, %v30
  %v32 = vrot.slane %v27, %v31
  %vm34 = vcmask 785408
  %v36 = vsel %vm34, %v14, 0
  %38 = vmatprep.subr.mxu0 0.0
  %39 = vmatpush1.msra.mxu0 %v15
  %40 = vmatprep.subr.mxu0 0.0
  %41 = vmatpush1.msra.mxu0 %v16
  %42 = vmatprep.subr.mxu0 0.0
  %43 = vmatpush1.msra.mxu0 %v17
  %44 = vmatprep.subr.mxu0 0.0
  %45 = vmatpush1.msra.mxu0 %v18
  %46 = vmatprep.subr.mxu0 0.0
  %47 = vmatpush1.msra.mxu0 %v19
  %48 = vmatprep.subr.mxu0 0.0
  %49 = vmatpush1.msra.mxu0 %v20
  %50 = vmatprep.subr.mxu0 0.0
  %51 = vmatpush1.msra.mxu0 %v21
  %52 = vmatprep.subr.mxu0 0.0
  %53 = vmatpush1.msra.mxu0 %v22
  %54 = vmatprep.subr.mxu0 0.0
  %55 = vmatpush1.msra.mxu0 %v23
  %56 = vmatprep.subr.mxu0 0.0
  %57 = vmatpush1.msra.mxu0 %v24
  %58 = vmatprep.subr.mxu0 0.0
  %59 = vmatpush1.msra.mxu0 %v25
  %60 = vmatprep.subr.mxu0 0.0
  %61 = vmatpush1.msra.mxu0 %v26
  %62 = vmatprep.subr.mxu0 0.0
  %63 = vmatpush1.msra.mxu0 0.0
  %64 = vmatprep.subr.mxu0 0.0
  %65 = vmatpush1.msra.mxu0 0.0
  %66 = vmatprep.subr.mxu0 0.0
  %67 = vmatpush1.msra.mxu0 0.0
  %68 = vmatprep.subr.mxu0 0.0
  %69 = vmatpush1.msra.mxu0 0.0
  %70 = vmatprep.subr.mxu0 0.0
  %71 = vmatpush1.msra.mxu0 0.0
  %72 = vmatprep.subr.mxu0 0.0
  %73 = vmatpush1.msra.mxu0 0.0
  %74 = vmatprep.subr.mxu0 0.0
  %75 = vmatpush1.msra.mxu0 0.0
  %76 = vmatprep.subr.mxu0 0.0
  %77 = vmatpush1.msra.mxu0 0.0
  %78 = vmatprep.subr.mxu0 0.0
  %79 = vmatpush1.msra.mxu0 0.0
  %80 = vmatprep.subr.mxu0 0.0
  %81 = vmatpush1.msra.mxu0 0.0
  %82 = vmatprep.subr.mxu0 0.0
  %83 = vmatpush1.msra.mxu0 0.0
  %84 = vmatprep.subr.mxu0 0.0
  %85 = vmatpush1.msra.mxu0 0.0
  %86 = vmatprep.subr.mxu0 0.0
  %87 = vmatpush1.msra.mxu0 0.0
  %88 = vmatprep.subr.mxu0 0.0
  %89 = vmatpush1.msra.mxu0 0.0
  %90 = vmatprep.subr.mxu0 0.0
  %91 = vmatpush1.msra.mxu0 0.0
  %92 = vmatprep.subr.mxu0 0.0
  %93 = vmatpush1.msra.mxu0 0.0
  %94 = vmatprep.subr.mxu0 0.0
  %95 = vmatpush1.msra.mxu0 0.0
  %96 = vmatprep.subr.mxu0 0.0
  %97 = vmatpush1.msra.mxu0 0.0
  %98 = vmatprep.subr.mxu0 0.0
  %99 = vmatpush1.msra.mxu0 0.0
  %100 = vmatprep.subr.mxu0 0.0
  %101 = vmatpush1.msra.mxu0 0.0
  %102 = vmatprep.mubr.f32.mxu0 0.0
  %103 = vmatmul.mubr.f32.gmra.mrb[0].mxu0 %v36
  %v104 = vpop.f32.mrb[0].mxu0
  %v105 = vadd.f32 %v32, %v104
  %v106 = vpop.f32.mrb[0].mxu0
  %107 = vdwg.mxu0
  %108 = vst [vmem:[%s3] sm:$0xff] %v105
  // Predicated region
  $region14: #{_lambda_.3} parent=0 // pred_check
    _
  $region15: #{_lambda_.3} parent=0 // pred_check_branch
    %110 = sbr.rel (0) target = $region17
  $region16: #{_lambda_.3} parent=0 // pred_region
    _
  $region17: #{_lambda_.3} parent=0 // pred_fallthru
    _
  // Predicated region
  $region18: #{_lambda_.3} parent=0 // pred_check
    _
  $region19: #{_lambda_.3} parent=0 // pred_check_branch
    %112 = sbr.rel (0) target = $region21
  $region20: #{_lambda_.3} parent=0 // pred_region
    _
  $region21: #{_lambda_.3} parent=0 // pred_fallthru
    _

// kernel: _lambda_.2
$region0: #{_lambda_.2}
  #allocation0 [shape = 'u32[]', space=smem, size = 0x4, offset = 0x4, fixed_abs, tag = 'smem constant byte address 0x4 - core index']
  #allocation1 [shape = 'u32[144,128]{1,0:T(1,128)}', space=vmem, size = 0x12000, scoped, tag = 'internal scratch']
  %s0 = inlined_call_operand.vmem [shape: f32[8,32], index: 0, kind: input, shape index: {}]
  %s1 = inlined_call_operand.vmem [shape: f32[8,32], index: 1, kind: input, shape index: {}]
  %s2 = inlined_call_operand.vmem [shape: f32[8,8,32], index: 2, kind: input, shape index: {}]
  %s3 = inlined_call_operand.vmem [shape: f32[32,32], index: 3, kind: input, shape index: {}]
  %s4 = inlined_call_operand.vmem [shape: f32[32,32], index: 4, kind: input, shape index: {}]
  %s5 = inlined_call_operand.vmem [shape: f32[1,32], index: 5, kind: input, shape index: {}]
  %s6 = inlined_call_operand.vmem [shape: f32[1,32], index: 6, kind: input, shape index: {}]
  %s7 = inlined_call_operand.vmem [shape: f32[64,96], index: 7, kind: input, shape index: {}]
  %s8 = inlined_call_operand.vmem [shape: f32[32,96], index: 8, kind: input, shape index: {}]
  %s9 = inlined_call_operand.vmem [shape: f32[1,96], index: 9, kind: input, shape index: {}]
  %s10 = inlined_call_operand.vmem [shape: f32[1,96], index: 10, kind: input, shape index: {}]
  %s11 = inlined_call_operand.vmem [shape: f32[8,96], index: 11, kind: output, shape index: {0}]
  %s12 = inlined_call_operand.vmem [shape: f32[8,32], index: 12, kind: output, shape index: {1}]
  %13 = xla_tuple %s11, %s12
  %s14 = sld [smem:[#allocation0]]
  $region62: #{_lambda_.2} parent=0
    _
  %s16 = ssub.s32 1, %s14
  %s17 = scalar_select 0, %s16, %s14
  // Predicated region
  $region2: #{_lambda_.2} parent=0 // pred_check
    _
  $region3: #{_lambda_.2} parent=0 // pred_check_branch
    %19 = sbr.rel (0) target = $region5
  $region4: #{_lambda_.2} parent=0 // pred_region
    _
  $region5: #{_lambda_.2} parent=0 // pred_fallthru
    _
  // Predicated region
  $region6: #{_lambda_.2} parent=0 // pred_check
    _
  $region7: #{_lambda_.2} parent=0 // pred_check_branch
    %21 = sbr.rel (0) target = $region9
  $region8: #{_lambda_.2} parent=0 // pred_region
    _
  $region9: #{_lambda_.2} parent=0 // pred_fallthru
    _
  // Predicated region
  $region10: #{_lambda_.2} parent=0 // pred_check
    _
  $region11: #{_lambda_.2} parent=0 // pred_check_branch
    %23 = sbr.rel (0) target = $region13
  $region12: #{_lambda_.2} parent=0 // pred_region
    _
  $region13: #{_lambda_.2} parent=0 // pred_fallthru
    _
  // Predicated region
  $region14: #{_lambda_.2} parent=0 // pred_check
    _
  $region15: #{_lambda_.2} parent=0 // pred_check_branch
    %25 = sbr.rel (0) target = $region17
  $region16: #{_lambda_.2} parent=0 // pred_region
    _
  $region17: #{_lambda_.2} parent=0 // pred_fallthru
    _
  // Predicated region
  $region18: #{_lambda_.2} parent=0 // pred_check
    _
  $region19: #{_lambda_.2} parent=0 // pred_check_branch
    %27 = sbr.rel (0) target = $region21
  $region20: #{_lambda_.2} parent=0 // pred_region
    _
  $region21: #{_lambda_.2} parent=0 // pred_fallthru
    _
  // Predicated region
  $region22: #{_lambda_.2} parent=0 // pred_check
    _
  $region23: #{_lambda_.2} parent=0 // pred_check_branch
    %29 = sbr.rel (0) target = $region25
  $region24: #{_lambda_.2} parent=0 // pred_region
    _
  $region25: #{_lambda_.2} parent=0 // pred_fallthru
    _
  // Predicated region
  $region26: #{_lambda_.2} parent=0 // pred_check
    _
  $region27: #{_lambda_.2} parent=0 // pred_check_branch
    %31 = sbr.rel (0) target = $region29
  $region28: #{_lambda_.2} parent=0 // pred_region
    _
  $region29: #{_lambda_.2} parent=0 // pred_fallthru
    _
  // Predicated region
  $region30: #{_lambda_.2} parent=0 // pred_check
    _
  $region31: #{_lambda_.2} parent=0 // pred_check_branch
    %33 = sbr.rel (0) target = $region33
  $region32: #{_lambda_.2} parent=0 // pred_region
    _
  $region33: #{_lambda_.2} parent=0 // pred_fallthru
    _
  // Predicated region
  $region34: #{_lambda_.2} parent=0 // pred_check
    _
  $region35: #{_lambda_.2} parent=0 // pred_check_branch
    %35 = sbr.rel (0) target = $region37
  $region36: #{_lambda_.2} parent=0 // pred_region
    _
  $region37: #{_lambda_.2} parent=0 // pred_fallthru
    _
  // Predicated region
  $region38: #{_lambda_.2} parent=0 // pred_check
    _
  $region39: #{_lambda_.2} parent=0 // pred_check_branch
    %37 = sbr.rel (0) target = $region41
  $region40: #{_lambda_.2} parent=0 // pred_region
    _
  $region41: #{_lambda_.2} parent=0 // pred_fallthru
    _
  // Predicated region
  $region42: #{_lambda_.2} parent=0 // pred_check
    _
  $region43: #{_lambda_.2} parent=0 // pred_check_branch
    %39 = sbr.rel (0) target = $region45
  $region44: #{_lambda_.2} parent=0 // pred_region
    _
  $region45: #{_lambda_.2} parent=0 // pred_fallthru
    _
  %v40 = vld [vmem:[%s0] sm:$0xff]
  %v41 = vld [vmem:[%s1] sm:$0xff]
  %v42 = vld [vmem:[%s2] sm:$0xff]
  %v43 = vld [vmem:[%s2 + $0x8] sm:$0xff]
  %v44 = vld [vmem:[%s2 + $0x10] sm:$0xff]
  %v45 = vld [vmem:[%s2 + $0x18] sm:$0xff]
  %v46 = vld [vmem:[%s2 + $0x20] sm:$0xff]
  %v47 = vld [vmem:[%s2 + $0x28] sm:$0xff]
  %v48 = vld [vmem:[%s2 + $0x30] sm:$0xff]
  %v49 = vld [vmem:[%s2 + $0x38] sm:$0xff]
  %v50 = vld [vmem:[%s4] sm:$0xff]
  %v51 = vld [vmem:[%s4 + $0x8] sm:$0xff]
  %v52 = vld [vmem:[%s4 + $0x10] sm:$0xff]
  %v53 = vld [vmem:[%s4 + $0x18] sm:$0xff]
  %vm54 = vcmask 261120
  %v56 = vsel %vm54, %v42, 0
  %v59 = vsel %vm54, %v43, 0
  %v62 = vsel %vm54, %v44, 0
  %v65 = vsel %vm54, %v45, 0
  %v68 = vsel %vm54, %v46, 0
  %v71 = vsel %vm54, %v47, 0
  %v74 = vsel %vm54, %v48, 0
  %v77 = vsel %vm54, %v49, 0
  %79 = vmatprep.subr.mxu0 0.0
  %80 = vmatpush1.msra.mxu0 %v50
  %81 = vmatprep.subr.mxu0 0.0
  %82 = vmatpush1.msra.mxu0 %v51
  %83 = vmatprep.subr.mxu0 0.0
  %84 = vmatpush1.msra.mxu0 %v52
  %85 = vmatprep.subr.mxu0 0.0
  %86 = vmatpush1.msra.mxu0 %v53
  %87 = vmatprep.subr.mxu0 0.0
  %88 = vmatpush1.msra.mxu0 0.0
  %89 = vmatprep.subr.mxu0 0.0
  %90 = vmatpush1.msra.mxu0 0.0
  %91 = vmatprep.subr.mxu0 0.0
  %92 = vmatpush1.msra.mxu0 0.0
  %93 = vmatprep.subr.mxu0 0.0
  %94 = vmatpush1.msra.mxu0 0.0
  %95 = vmatprep.subr.mxu0 0.0
  %96 = vmatpush1.msra.mxu0 0.0
  %97 = vmatprep.subr.mxu0 0.0
  %98 = vmatpush1.msra.mxu0 0.0
  %99 = vmatprep.subr.mxu0 0.0
  %100 = vmatpush1.msra.mxu0 0.0
  %101 = vmatprep.subr.mxu0 0.0
  %102 = vmatpush1.msra.mxu0 0.0
  %103 = vmatprep.subr.mxu0 0.0
  %104 = vmatpush1.msra.mxu0 0.0
  %105 = vmatprep.subr.mxu0 0.0
  %106 = vmatpush1.msra.mxu0 0.0
  %107 = vmatprep.subr.mxu0 0.0
  %108 = vmatpush1.msra.mxu0 0.0
  %109 = vmatprep.subr.mxu0 0.0
  %110 = vmatpush1.msra.mxu0 0.0
  %111 = vmatprep.subr.mxu0 0.0
  %112 = vmatpush1.msra.mxu0 0.0
  %113 = vmatprep.subr.mxu0 0.0
  %114 = vmatpush1.msra.mxu0 0.0
  %115 = vmatprep.subr.mxu0 0.0
  %116 = vmatpush1.msra.mxu0 0.0
  %117 = vmatprep.subr.mxu0 0.0
  %118 = vmatpush1.msra.mxu0 0.0
  %119 = vmatprep.subr.mxu0 0.0
  %120 = vmatpush1.msra.mxu0 0.0
  %121 = vmatprep.subr.mxu0 0.0
  %122 = vmatpush1.msra.mxu0 0.0
  %123 = vmatprep.subr.mxu0 0.0
  %124 = vmatpush1.msra.mxu0 0.0
  %125 = vmatprep.subr.mxu0 0.0
  %126 = vmatpush1.msra.mxu0 0.0
  %127 = vmatprep.subr.mxu0 0.0
  %128 = vmatpush1.msra.mxu0 0.0
  %129 = vmatprep.subr.mxu0 0.0
  %130 = vmatpush1.msra.mxu0 0.0
  %131 = vmatprep.subr.mxu0 0.0
  %132 = vmatpush1.msra.mxu0 0.0
  %133 = vmatprep.subr.mxu0 0.0
  %134 = vmatpush1.msra.mxu0 0.0
  %135 = vmatprep.subr.mxu0 0.0
  %136 = vmatpush1.msra.mxu0 0.0
  %137 = vmatprep.subr.mxu0 0.0
  %138 = vmatpush1.msra.mxu0 0.0
  %139 = vmatprep.subr.mxu0 0.0
  %140 = vmatpush1.msra.mxu0 0.0
  %141 = vmatprep.subr.mxu0 0.0
  %142 = vmatpush1.msra.mxu0 0.0
  %143 = vmatprep.mubr.f32.mxu0 0.0
  %144 = vmatmul.mubr.f32.gmra.mrb[0].mxu0 %v56
  %v145 = vpop.f32.mrb[0].mxu0
  %v146 = vadd.f32 0.0, %v145
  %v147 = vpop.f32.mrb[0].mxu0
  %148 = vmatprep.mubr.f32.mxu0 0.0
  %149 = vmatmul.mubr.f32.gmra.mrb[0].mxu0 %v59
  %v150 = vpop.f32.mrb[0].mxu0
  %v151 = vadd.f32 0.0, %v150
  %v152 = vpop.f32.mrb[0].mxu0
  %153 = vmatprep.mubr.f32.mxu0 0.0
  %154 = vmatmul.mubr.f32.gmra.mrb[0].mxu0 %v62
  %v155 = vpop.f32.mrb[0].mxu0
  %v156 = vadd.f32 0.0, %v155
  %v157 = vpop.f32.mrb[0].mxu0
  %158 = vmatprep.mubr.f32.mxu0 0.0
  %159 = vmatmul.mubr.f32.gmra.mrb[0].mxu0 %v65
  %v160 = vpop.f32.mrb[0].mxu0
  %v161 = vadd.f32 0.0, %v160
  %v162 = vpop.f32.mrb[0].mxu0
  %163 = vmatprep.mubr.f32.mxu0 0.0
  %164 = vmatmul.mubr.f32.gmra.mrb[0].mxu0 %v68
  %v165 = vpop.f32.mrb[0].mxu0
  %v166 = vadd.f32 0.0, %v165
  %v167 = vpop.f32.mrb[0].mxu0
  %168 = vmatprep.mubr.f32.mxu0 0.0
  %169 = vmatmul.mubr.f32.gmra.mrb[0].mxu0 %v71
  %v170 = vpop.f32.mrb[0].mxu0
  %v171 = vadd.f32 0.0, %v170
  %v172 = vpop.f32.mrb[0].mxu0
  %173 = vmatprep.mubr.f32.mxu0 0.0
  %174 = vmatmul.mubr.f32.gmra.mrb[0].mxu0 %v74
  %v175 = vpop.f32.mrb[0].mxu0
  %v176 = vadd.f32 0.0, %v175
  %v177 = vpop.f32.mrb[0].mxu0
  %178 = vmatprep.mubr.f32.mxu0 0.0
  %179 = vmatmul.mubr.f32.gmra.mrb[0].mxu0 %v77
  %v180 = vpop.f32.mrb[0].mxu0
  %v181 = vadd.f32 0.0, %v180
  %v182 = vpop.f32.mrb[0].mxu0
  %183 = vdwg.mxu0
  %v184 = vld [vmem:[%s3] sm:$0xff]
  %v185 = vld [vmem:[%s3 + $0x8] sm:$0xff]
  %v186 = vld [vmem:[%s3 + $0x10] sm:$0xff]
  %v187 = vld [vmem:[%s3 + $0x18] sm:$0xff]
  %v189 = vsel %vm54, %v41, 0
  %191 = vmatprep.subr.mxu0 0.0
  %192 = vmatpush1.msra.mxu0 %v184
  %193 = vmatprep.subr.mxu0 0.0
  %194 = vmatpush1.msra.mxu0 %v185
  %195 = vmatprep.subr.mxu0 0.0
  %196 = vmatpush1.msra.mxu0 %v186
  %197 = vmatprep.subr.mxu0 0.0
  %198 = vmatpush1.msra.mxu0 %v187
  %199 = vmatprep.subr.mxu0 0.0
  %200 = vmatpush1.msra.mxu0 0.0
  %201 = vmatprep.subr.mxu0 0.0
  %202 = vmatpush1.msra.mxu0 0.0
  %203 = vmatprep.subr.mxu0 0.0
  %204 = vmatpush1.msra.mxu0 0.0
  %205 = vmatprep.subr.mxu0 0.0
  %206 = vmatpush1.msra.mxu0 0.0
  %207 = vmatprep.subr.mxu0 0.0
  %208 = vmatpush1.msra.mxu0 0.0
  %209 = vmatprep.subr.mxu0 0.0
  %210 = vmatpush1.msra.mxu0 0.0
  %211 = vmatprep.subr.mxu0 0.0
  %212 = vmatpush1.msra.mxu0 0.0
  %213 = vmatprep.subr.mxu0 0.0
  %214 = vmatpush1.msra.mxu0 0.0
  %215 = vmatprep.subr.mxu0 0.0
  %216 = vmatpush1.msra.mxu0 0.0
  %217 = vmatprep.subr.mxu0 0.0
  %218 = vmatpush1.msra.mxu0 0.0
  %219 = vmatprep.subr.mxu0 0.0
  %220 = vmatpush1.msra.mxu0 0.0
  %221 = vmatprep.subr.mxu0 0.0
  %222 = vmatpush1.msra.mxu0 0.0
  %223 = vmatprep.subr.mxu0 0.0
  %224 = vmatpush1.msra.mxu0 0.0
  %225 = vmatprep.subr.mxu0 0.0
  %226 = vmatpush1.msra.mxu0 0.0
  %227 = vmatprep.subr.mxu0 0.0
  %228 = vmatpush1.msra.mxu0 0.0
  %229 = vmatprep.subr.mxu0 0.0
  %230 = vmatpush1.msra.mxu0 0.0
  %231 = vmatprep.subr.mxu0 0.0
  %232 = vmatpush1.msra.mxu0 0.0
  %233 = vmatprep.subr.mxu0 0.0
  %234 = vmatpush1.msra.mxu0 0.0
  %235 = vmatprep.subr.mxu0 0.0
  %236 = vmatpush1.msra.mxu0 0.0
  %237 = vmatprep.subr.mxu0 0.0
  %238 = vmatpush1.msra.mxu0 0.0
  %239 = vmatprep.subr.mxu0 0.0
  %240 = vmatpush1.msra.mxu0 0.0
  %241 = vmatprep.subr.mxu0 0.0
  %242 = vmatpush1.msra.mxu0 0.0
  %243 = vmatprep.subr.mxu0 0.0
  %244 = vmatpush1.msra.mxu0 0.0
  %245 = vmatprep.subr.mxu0 0.0
  %246 = vmatpush1.msra.mxu0 0.0
  %247 = vmatprep.subr.mxu0 0.0
  %248 = vmatpush1.msra.mxu0 0.0
  %249 = vmatprep.subr.mxu0 0.0
  %250 = vmatpush1.msra.mxu0 0.0
  %251 = vmatprep.subr.mxu0 0.0
  %252 = vmatpush1.msra.mxu0 0.0
  %253 = vmatprep.subr.mxu0 0.0
  %254 = vmatpush1.msra.mxu0 0.0
  %255 = vmatprep.mubr.f32.mxu0 0.0
  %256 = vmatmul.mubr.f32.gmra.mrb[0].mxu0 %v189
  %v257 = vpop.f32.mrb[0].mxu0
  %v258 = vadd.f32 0.0, %v257
  %v259 = vpop.f32.mrb[0].mxu0
  %260 = vdwg.mxu0
  %v262 = vcombine.high %v258, %v258
  %v264 = vunpack.c.l.s4 1966171168
  %v265 = vunpack.c.0.s8 %v264
  %v266 = vlaneseq
  %v267 = vshrl.u32 %v266, 7
  %v268 = vsub.s32 %v265, %v267
  %v269 = vrot.slane %v258, %v268
  %v271 = vunpack.c.l.s4 1966171168
  %v272 = vunpack.c.0.s8 %v271
  %v273 = vlaneseq
  %v274 = vshrl.u32 %v273, 7
  %v275 = vsub.s32 %v272, %v274
  %v276 = vrot.slane %v262, %v275
  %v277 = vcombine.high %v269, %v269
  %v278 = vcombine.high %v276, %v276
  %v280 = vunpack.c.l.s4 1966171168
  %v281 = vunpack.c.0.s8 %v280
  %v282 = vlaneseq
  %v283 = vshrl.u32 %v282, 7
  %v284 = vsub.s32 %v281, %v283
  %v285 = vrot.slane %v269, %v284
  %v287 = vunpack.c.l.s4 1966171168
  %v288 = vunpack.c.0.s8 %v287
  %v289 = vlaneseq
  %v290 = vshrl.u32 %v289, 7
  %v291 = vsub.s32 %v288, %v290
  %v292 = vrot.slane %v276, %v291
  %v294 = vunpack.c.l.s4 1966171168
  %v295 = vunpack.c.0.s8 %v294
  %v296 = vlaneseq
  %v297 = vshrl.u32 %v296, 7
  %v298 = vsub.s32 %v295, %v297
  %v299 = vrot.slane %v277, %v298
  %v301 = vunpack.c.l.s4 1966171168
  %v302 = vunpack.c.0.s8 %v301
  %v303 = vlaneseq
  %v304 = vshrl.u32 %v303, 7
  %v305 = vsub.s32 %v302, %v304
  %v306 = vrot.slane %v278, %v305
  %v307 = vcombine.high %v285, %v285
  %v308 = vcombine.high %v292, %v292
  %v309 = vcombine.high %v299, %v299
  %v310 = vcombine.high %v306, %v306
  %v311 = vlaneseq
  %v312 = vshrl.u32 %v311, 7
  %v313 = vsub.s32 0, %v312
  %v314 = vrot.slane %v285, %v313
  %v315 = vlaneseq
  %v316 = vshrl.u32 %v315, 7
  %v317 = vsub.s32 0, %v316
  %v318 = vrot.slane %v299, %v317
  %v319 = vlaneseq
  %v320 = vshrl.u32 %v319, 7
  %v321 = vsub.s32 0, %v320
  %v322 = vrot.slane %v307, %v321
  %v323 = vlaneseq
  %v324 = vshrl.u32 %v323, 7
  %v325 = vsub.s32 0, %v324
  %v326 = vrot.slane %v309, %v325
  %v327 = vlaneseq
  %v328 = vshrl.u32 %v327, 7
  %v329 = vsub.s32 0, %v328
  %v330 = vrot.slane %v292, %v329
  %v331 = vlaneseq
  %v332 = vshrl.u32 %v331, 7
  %v333 = vsub.s32 0, %v332
  %v334 = vrot.slane %v306, %v333
  %v335 = vlaneseq
  %v336 = vshrl.u32 %v335, 7
  %v337 = vsub.s32 0, %v336
  %v338 = vrot.slane %v308, %v337
  %v339 = vlaneseq
  %v340 = vshrl.u32 %v339, 7
  %v341 = vsub.s32 0, %v340
  %v342 = vrot.slane %v310, %v341
  %v351 = vadd.f32 %v146, %v314
  %v352 = vadd.f32 %v151, %v318
  %v353 = vadd.f32 %v156, %v322
  %v354 = vadd.f32 %v161, %v326
  %v355 = vadd.f32 %v166, %v330
  %v356 = vadd.f32 %v171, %v334
  %v357 = vadd.f32 %v176, %v338
  %v358 = vadd.f32 %v181, %v342
  %v359 = vld [vmem:[%s5] sm:$0x1]
  %v361 = vlaneseq
  %v362 = vshrl.u32 %v361, 7
  %v363 = vsub.s32 0, %v362
  %v364 = vrot.slane %v359, %v363
  %v366 = vadd.f32 %v351, %v364
  %v367 = vadd.f32 %v352, %v364
  %v368 = vadd.f32 %v353, %v364
  %v369 = vadd.f32 %v354, %v364
  %v370 = vadd.f32 %v355, %v364
  %v371 = vadd.f32 %v356, %v364
  %v372 = vadd.f32 %v357, %v364
  %v373 = vadd.f32 %v358, %v364
  %v374 = vtanh.pop %v366
  %v375 = vtanh.pop %v367
  %v376 = vtanh.pop %v368
  %v377 = vtanh.pop %v369
  %v378 = vtanh.pop %v370
  %v379 = vtanh.pop %v371
  %v380 = vtanh.pop %v372
  %v381 = vtanh.pop %v373
  %v382 = vld [vmem:[%s6] sm:$0x1]
  %v384 = vlaneseq
  %v385 = vshrl.u32 %v384, 7
  %v386 = vsub.s32 0, %v385
  %v387 = vrot.slane %v382, %v386
  %v389 = vmul.f32 %v374, %v387
  %v390 = vmul.f32 %v375, %v387
  %v391 = vmul.f32 %v376, %v387
  %v392 = vmul.f32 %v377, %v387
  %v393 = vmul.f32 %v378, %v387
  %v394 = vmul.f32 %v379, %v387
  %v395 = vmul.f32 %v380, %v387
  %v396 = vmul.f32 %v381, %v387
  %v397 = vsel %vm54, %v389, 0.0
  %398 = vadd.xlane.f32.xlu0 %v397
  %v399 = vpop.xlane.xlu0 %398
  %v400 = vsel %vm54, %v390, 0.0
  %401 = vadd.xlane.f32.xlu0 %v400
  %v402 = vpop.xlane.xlu0 %401
  %v403 = vsel %vm54, %v391, 0.0
  %404 = vadd.xlane.f32.xlu0 %v403
  %v405 = vpop.xlane.xlu0 %404
  %v406 = vsel %vm54, %v392, 0.0
  %407 = vadd.xlane.f32.xlu0 %v406
  %v408 = vpop.xlane.xlu0 %407
  %v409 = vsel %vm54, %v393, 0.0
  %410 = vadd.xlane.f32.xlu0 %v409
  %v411 = vpop.xlane.xlu0 %410
  %v412 = vsel %vm54, %v394, 0.0
  %413 = vadd.xlane.f32.xlu0 %v412
  %v414 = vpop.xlane.xlu0 %413
  %v415 = vsel %vm54, %v395, 0.0
  %416 = vadd.xlane.f32.xlu0 %v415
  %v417 = vpop.xlane.xlu0 %416
  %v418 = vsel %vm54, %v396, 0.0
  %419 = vadd.xlane.f32.xlu0 %v418
  %v420 = vpop.xlane.xlu0 %419
  %v429 = vlaneseq
  %v430 = vand.u32 %v429, 127
  %v431 = vlaneseq
  %v432 = vshrl.u32 %v431, 7
  %v433 = vsub.s32 %v430, %v432
  %v434 = vrot.slane %v399, %v433
  %v435 = vlaneseq
  %v436 = vshrl.u32 %v435, 7
  %v437 = vsub.s32 %v430, %v436
  %v438 = vrot.slane %v402, %v437
  %v439 = vlaneseq
  %v440 = vshrl.u32 %v439, 7
  %v441 = vsub.s32 %v430, %v440
  %v442 = vrot.slane %v405, %v441
  %v443 = vlaneseq
  %v444 = vshrl.u32 %v443, 7
  %v445 = vsub.s32 %v430, %v444
  %v446 = vrot.slane %v408, %v445
  %v447 = vlaneseq
  %v448 = vshrl.u32 %v447, 7
  %v449 = vsub.s32 %v430, %v448
  %v450 = vrot.slane %v411, %v449
  %v451 = vlaneseq
  %v452 = vshrl.u32 %v451, 7
  %v453 = vsub.s32 %v430, %v452
  %v454 = vrot.slane %v414, %v453
  %v455 = vlaneseq
  %v456 = vshrl.u32 %v455, 7
  %v457 = vsub.s32 %v430, %v456
  %v458 = vrot.slane %v417, %v457
  %v459 = vlaneseq
  %v460 = vshrl.u32 %v459, 7
  %v461 = vsub.s32 %v430, %v460
  %v462 = vrot.slane %v420, %v461
  %vm463 = vcmask 1041409
  %v464 = vsel %vm463, %v438, %v434
  %vm465 = vcmask 1042434
  %v466 = vsel %vm465, %v442, %v464
  %vm467 = vcmask 1043459
  %v468 = vsel %vm467, %v446, %v466
  %vm469 = vcmask 1044484
  %v470 = vsel %vm469, %v450, %v468
  %vm471 = vcmask 1045509
  %v472 = vsel %vm471, %v454, %v470
  %vm473 = vcmask 1046534
  %v474 = vsel %vm473, %v458, %v472
  %vm475 = vcmask 1047559
  %v476 = vsel %vm475, %v462, %v474
  %vm478 = vcmask 64512
  %v479 = vsel %vm478, %v476, -inf
  %480 = vmax.xlane.f32.xlu0 %v479
  %v481 = vpop.xlane.xlu0 %480
  %v483 = vlaneseq
  %v484 = vshrl.u32 %v483, 7
  %v485 = vsub.s32 0, %v484
  %v486 = vrot.slane %v481, %v485
  %v487 = vlaneseq
  %v488 = vshrl.u32 %v487, 7
  %v489 = vsub.s32 1, %v488
  %v490 = vrot.slane %v481, %v489
  %v491 = vlaneseq
  %v492 = vshrl.u32 %v491, 7
  %v493 = vsub.s32 2, %v492
  %v494 = vrot.slane %v481, %v493
  %v495 = vlaneseq
  %v496 = vshrl.u32 %v495, 7
  %v497 = vsub.s32 3, %v496
  %v498 = vrot.slane %v481, %v497
  %v499 = vlaneseq
  %v500 = vshrl.u32 %v499, 7
  %v501 = vsub.s32 4, %v500
  %v502 = vrot.slane %v481, %v501
  %v503 = vlaneseq
  %v504 = vshrl.u32 %v503, 7
  %v505 = vsub.s32 5, %v504
  %v506 = vrot.slane %v481, %v505
  %v507 = vlaneseq
  %v508 = vshrl.u32 %v507, 7
  %v509 = vsub.s32 6, %v508
  %v510 = vrot.slane %v481, %v509
  %v511 = vlaneseq
  %v512 = vshrl.u32 %v511, 7
  %v513 = vsub.s32 7, %v512
  %v514 = vrot.slane %v481, %v513
  %v523 = vsub.f32 %v399, %v486
  %v524 = vsub.f32 %v402, %v490
  %v525 = vsub.f32 %v405, %v494
  %v526 = vsub.f32 %v408, %v498
  %v527 = vsub.f32 %v411, %v502
  %v528 = vsub.f32 %v414, %v506
  %v529 = vsub.f32 %v417, %v510
  %v530 = vsub.f32 %v420, %v514
  %v531 = vmul.f32 %v523, 1.442695
  %v532 = vpow.pop %v531
  %v533 = vmul.f32 %v524, 1.442695
  %v534 = vpow.pop %v533
  %v535 = vmul.f32 %v525, 1.442695
  %v536 = vpow.pop %v535
  %v537 = vmul.f32 %v526, 1.442695
  %v538 = vpow.pop %v537
  %v539 = vmul.f32 %v527, 1.442695
  %v540 = vpow.pop %v539
  %v541 = vmul.f32 %v528, 1.442695
  %v542 = vpow.pop %v541
  %v543 = vmul.f32 %v529, 1.442695
  %v544 = vpow.pop %v543
  %v545 = vmul.f32 %v530, 1.442695
  %v546 = vpow.pop %v545
  %555 = vset.pattern.permute.xlu0 0
  %556 = vperm.xlu0 %555, %v532
  %v557 = vpop.permute.xlu0 %556
  %558 = vset.pattern.permute.xlu0 0
  %559 = vperm.xlu0 %558, %v534
  %v560 = vpop.permute.xlu0 %559
  %561 = vset.pattern.permute.xlu0 0
  %562 = vperm.xlu0 %561, %v536
  %v563 = vpop.permute.xlu0 %562
  %564 = vset.pattern.permute.xlu0 0
  %565 = vperm.xlu0 %564, %v538
  %v566 = vpop.permute.xlu0 %565
  %567 = vset.pattern.permute.xlu0 0
  %568 = vperm.xlu0 %567, %v540
  %v569 = vpop.permute.xlu0 %568
  %570 = vset.pattern.permute.xlu0 0
  %571 = vperm.xlu0 %570, %v542
  %v572 = vpop.permute.xlu0 %571
  %573 = vset.pattern.permute.xlu0 0
  %574 = vperm.xlu0 %573, %v544
  %v575 = vpop.permute.xlu0 %574
  %576 = vset.pattern.permute.xlu0 0
  %577 = vperm.xlu0 %576, %v546
  %v578 = vpop.permute.xlu0 %577
  %v579 = vlaneseq
  %v580 = vshrl.u32 %v579, 7
  %v581 = vsub.s32 %v430, %v580
  %v582 = vrot.slane %v557, %v581
  %v583 = vlaneseq
  %v584 = vshrl.u32 %v583, 7
  %v585 = vsub.s32 %v430, %v584
  %v586 = vrot.slane %v560, %v585
  %v587 = vlaneseq
  %v588 = vshrl.u32 %v587, 7
  %v589 = vsub.s32 %v430, %v588
  %v590 = vrot.slane %v563, %v589
  %v591 = vlaneseq
  %v592 = vshrl.u32 %v591, 7
  %v593 = vsub.s32 %v430, %v592
  %v594 = vrot.slane %v566, %v593
  %v595 = vlaneseq
  %v596 = vshrl.u32 %v595, 7
  %v597 = vsub.s32 %v430, %v596
  %v598 = vrot.slane %v569, %v597
  %v599 = vlaneseq
  %v600 = vshrl.u32 %v599, 7
  %v601 = vsub.s32 %v430, %v600
  %v602 = vrot.slane %v572, %v601
  %v603 = vlaneseq
  %v604 = vshrl.u32 %v603, 7
  %v605 = vsub.s32 %v430, %v604
  %v606 = vrot.slane %v575, %v605
  %v607 = vlaneseq
  %v608 = vshrl.u32 %v607, 7
  %v609 = vsub.s32 %v430, %v608
  %v610 = vrot.slane %v578, %v609
  %v611 = vsel %vm463, %v586, %v582
  %v612 = vsel %vm465, %v590, %v611
  %v613 = vsel %vm467, %v594, %v612
  %v614 = vsel %vm469, %v598, %v613
  %v615 = vsel %vm471, %v602, %v614
  %v616 = vsel %vm473, %v606, %v615
  %v617 = vsel %vm475, %v610, %v616
  %v619 = vsel %vm478, %v617, 0.0
  %620 = vadd.xlane.f32.xlu0 %v619
  %v621 = vpop.xlane.xlu0 %620
  %v623 = vlaneseq
  %v624 = vshrl.u32 %v623, 7
  %v625 = vsub.s32 0, %v624
  %v626 = vrot.slane %v621, %v625
  %v627 = vlaneseq
  %v628 = vshrl.u32 %v627, 7
  %v629 = vsub.s32 1, %v628
  %v630 = vrot.slane %v621, %v629
  %v631 = vlaneseq
  %v632 = vshrl.u32 %v631, 7
  %v633 = vsub.s32 2, %v632
  %v634 = vrot.slane %v621, %v633
  %v635 = vlaneseq
  %v636 = vshrl.u32 %v635, 7
  %v637 = vsub.s32 3, %v636
  %v638 = vrot.slane %v621, %v637
  %v639 = vlaneseq
  %v640 = vshrl.u32 %v639, 7
  %v641 = vsub.s32 4, %v640
  %v642 = vrot.slane %v621, %v641
  %v643 = vlaneseq
  %v644 = vshrl.u32 %v643, 7
  %v645 = vsub.s32 5, %v644
  %v646 = vrot.slane %v621, %v645
  %v647 = vlaneseq
  %v648 = vshrl.u32 %v647, 7
  %v649 = vsub.s32 6, %v648
  %v650 = vrot.slane %v621, %v649
  %v651 = vlaneseq
  %v652 = vshrl.u32 %v651, 7
  %v653 = vsub.s32 7, %v652
  %v654 = vrot.slane %v621, %v653
  %v663 = vrcp.pop %v626
  %v664 = vmul.f32 %v532, %v663
  %v665 = vrcp.pop %v630
  %v666 = vmul.f32 %v534, %v665
  %v667 = vrcp.pop %v634
  %v668 = vmul.f32 %v536, %v667
  %v669 = vrcp.pop %v638
  %v670 = vmul.f32 %v538, %v669
  %v671 = vrcp.pop %v642
  %v672 = vmul.f32 %v540, %v671
  %v673 = vrcp.pop %v646
  %v674 = vmul.f32 %v542, %v673
  %v675 = vrcp.pop %v650
  %v676 = vmul.f32 %v544, %v675
  %v677 = vrcp.pop %v654
  %v678 = vmul.f32 %v546, %v677
  %680 = vset.pattern.permute.xlu0 0
  %681 = vperm.xlu0 %680, %v664
  %v682 = vpop.permute.xlu0 %681
  %685 = vset.pattern.permute.xlu0 0
  %686 = vperm.xlu0 %685, %v666
  %v687 = vpop.permute.xlu0 %686
  %690 = vset.pattern.permute.xlu0 0
  %691 = vperm.xlu0 %690, %v668
  %v692 = vpop.permute.xlu0 %691
  %695 = vset.pattern.permute.xlu0 0
  %696 = vperm.xlu0 %695, %v670
  %v697 = vpop.permute.xlu0 %696
  %700 = vset.pattern.permute.xlu0 0
  %701 = vperm.xlu0 %700, %v672
  %v702 = vpop.permute.xlu0 %701
  %705 = vset.pattern.permute.xlu0 0
  %706 = vperm.xlu0 %705, %v674
  %v707 = vpop.permute.xlu0 %706
  %710 = vset.pattern.permute.xlu0 0
  %711 = vperm.xlu0 %710, %v676
  %v712 = vpop.permute.xlu0 %711
  %715 = vset.pattern.permute.xlu0 0
  %716 = vperm.xlu0 %715, %v678
  %v717 = vpop.permute.xlu0 %716
  %v719 = vmul.f32 %v682, %v42
  %v720 = vmul.f32 %v687, %v43
  %v721 = vmul.f32 %v692, %v44
  %v722 = vmul.f32 %v697, %v45
  %v723 = vmul.f32 %v702, %v46
  %v724 = vmul.f32 %v707, %v47
  %v725 = vmul.f32 %v712, %v48
  %v726 = vmul.f32 %v717, %v49
  %v727 = vsel %vm54, %v719, 0.0
  %v728 = vrot.slane %v727, 4
  %v729 = vadd.f32 %v727, %v728
  %v730 = vrot.slane %v729, 2
  %v731 = vadd.f32 %v729, %v730
  %v732 = vrot.slane %v731, 1
  %v733 = vadd.f32 %v731, %v732
  %v734 = vsel %vm54, %v720, 0.0
  %v735 = vrot.slane %v734, 4
  %v736 = vadd.f32 %v734, %v735
  %v737 = vrot.slane %v736, 2
  %v738 = vadd.f32 %v736, %v737
  %v739 = vrot.slane %v738, 1
  %v740 = vadd.f32 %v738, %v739
  %v741 = vsel %vm54, %v721, 0.0
  %v742 = vrot.slane %v741, 4
  %v743 = vadd.f32 %v741, %v742
  %v744 = vrot.slane %v743, 2
  %v745 = vadd.f32 %v743, %v744
  %v746 = vrot.slane %v745, 1
  %v747 = vadd.f32 %v745, %v746
  %v748 = vsel %vm54, %v722, 0.0
  %v749 = vrot.slane %v748, 4
  %v750 = vadd.f32 %v748, %v749
  %v751 = vrot.slane %v750, 2
  %v752 = vadd.f32 %v750, %v751
  %v753 = vrot.slane %v752, 1
  %v754 = vadd.f32 %v752, %v753
  %v755 = vsel %vm54, %v723, 0.0
  %v756 = vrot.slane %v755, 4
  %v757 = vadd.f32 %v755, %v756
  %v758 = vrot.slane %v757, 2
  %v759 = vadd.f32 %v757, %v758
  %v760 = vrot.slane %v759, 1
  %v761 = vadd.f32 %v759, %v760
  %v762 = vsel %vm54, %v724, 0.0
  %v763 = vrot.slane %v762, 4
  %v764 = vadd.f32 %v762, %v763
  %v765 = vrot.slane %v764, 2
  %v766 = vadd.f32 %v764, %v765
  %v767 = vrot.slane %v766, 1
  %v768 = vadd.f32 %v766, %v767
  %v769 = vsel %vm54, %v725, 0.0
  %v770 = vrot.slane %v769, 4
  %v771 = vadd.f32 %v769, %v770
  %v772 = vrot.slane %v771, 2
  %v773 = vadd.f32 %v771, %v772
  %v774 = vrot.slane %v773, 1
  %v775 = vadd.f32 %v773, %v774
  %v776 = vsel %vm54, %v726, 0.0
  %v777 = vrot.slane %v776, 4
  %v778 = vadd.f32 %v776, %v777
  %v779 = vrot.slane %v778, 2
  %v780 = vadd.f32 %v778, %v779
  %v781 = vrot.slane %v780, 1
  %v782 = vadd.f32 %v780, %v781
  %v791 = vsel %vm463, %v740, %v733
  %v792 = vsel %vm465, %v747, %v791
  %v793 = vsel %vm467, %v754, %v792
  %v794 = vsel %vm469, %v761, %v793
  %v795 = vsel %vm471, %v768, %v794
  %v796 = vsel %vm473, %v775, %v795
  %v797 = vsel %vm475, %v782, %v796
  %800 = vrot.lane.b32.xlu0 %v40, 32
  %v801 = vpop.permute.xlu0 %800
  %v803 = vsel %vm54, %v797, %v801
  %v804 = vld [vmem:[%s7] sm:$0xff]
  %v805 = vld [vmem:[%s7 + $0x8] sm:$0xff]
  %v806 = vld [vmem:[%s7 + $0x10] sm:$0xff]
  %v807 = vld [vmem:[%s7 + $0x18] sm:$0xff]
  %v808 = vld [vmem:[%s7 + $0x20] sm:$0xff]
  %v809 = vld [vmem:[%s7 + $0x28] sm:$0xff]
  %v810 = vld [vmem:[%s7 + $0x30] sm:$0xff]
  %v811 = vld [vmem:[%s7 + $0x38] sm:$0xff]
  %v812 = vld [vmem:[%s9] sm:$0x1]
  %v814 = vlaneseq
  %v815 = vshrl.u32 %v814, 7
  %v816 = vsub.s32 0, %v815
  %v817 = vrot.slane %v812, %v816
  %vm819 = vcmask 523264
  %v821 = vsel %vm819, %v803, 0
  %823 = vmatprep.subr.mxu0 0.0
  %824 = vmatpush1.msra.mxu0 %v804
  %825 = vmatprep.subr.mxu0 0.0
  %826 = vmatpush1.msra.mxu0 %v805
  %827 = vmatprep.subr.mxu0 0.0
  %828 = vmatpush1.msra.mxu0 %v806
  %829 = vmatprep.subr.mxu0 0.0
  %830 = vmatpush1.msra.mxu0 %v807
  %831 = vmatprep.subr.mxu0 0.0
  %832 = vmatpush1.msra.mxu0 %v808
  %833 = vmatprep.subr.mxu0 0.0
  %834 = vmatpush1.msra.mxu0 %v809
  %835 = vmatprep.subr.mxu0 0.0
  %836 = vmatpush1.msra.mxu0 %v810
  %837 = vmatprep.subr.mxu0 0.0
  %838 = vmatpush1.msra.mxu0 %v811
  %839 = vmatprep.subr.mxu0 0.0
  %840 = vmatpush1.msra.mxu0 0.0
  %841 = vmatprep.subr.mxu0 0.0
  %842 = vmatpush1.msra.mxu0 0.0
  %843 = vmatprep.subr.mxu0 0.0
  %844 = vmatpush1.msra.mxu0 0.0
  %845 = vmatprep.subr.mxu0 0.0
  %846 = vmatpush1.msra.mxu0 0.0
  %847 = vmatprep.subr.mxu0 0.0
  %848 = vmatpush1.msra.mxu0 0.0
  %849 = vmatprep.subr.mxu0 0.0
  %850 = vmatpush1.msra.mxu0 0.0
  %851 = vmatprep.subr.mxu0 0.0
  %852 = vmatpush1.msra.mxu0 0.0
  %853 = vmatprep.subr.mxu0 0.0
  %854 = vmatpush1.msra.mxu0 0.0
  %855 = vmatprep.subr.mxu0 0.0
  %856 = vmatpush1.msra.mxu0 0.0
  %857 = vmatprep.subr.mxu0 0.0
  %858 = vmatpush1.msra.mxu0 0.0
  %859 = vmatprep.subr.mxu0 0.0
  %860 = vmatpush1.msra.mxu0 0.0
  %861 = vmatprep.subr.mxu0 0.0
  %862 = vmatpush1.msra.mxu0 0.0
  %863 = vmatprep.subr.mxu0 0.0
  %864 = vmatpush1.msra.mxu0 0.0
  %865 = vmatprep.subr.mxu0 0.0
  %866 = vmatpush1.msra.mxu0 0.0
  %867 = vmatprep.subr.mxu0 0.0
  %868 = vmatpush1.msra.mxu0 0.0
  %869 = vmatprep.subr.mxu0 0.0
  %870 = vmatpush1.msra.mxu0 0.0
  %871 = vmatprep.subr.mxu0 0.0
  %872 = vmatpush1.msra.mxu0 0.0
  %873 = vmatprep.subr.mxu0 0.0
  %874 = vmatpush1.msra.mxu0 0.0
  %875 = vmatprep.subr.mxu0 0.0
  %876 = vmatpush1.msra.mxu0 0.0
  %877 = vmatprep.subr.mxu0 0.0
  %878 = vmatpush1.msra.mxu0 0.0
  %879 = vmatprep.subr.mxu0 0.0
  %880 = vmatpush1.msra.mxu0 0.0
  %881 = vmatprep.subr.mxu0 0.0
  %882 = vmatpush1.msra.mxu0 0.0
  %883 = vmatprep.subr.mxu0 0.0
  %884 = vmatpush1.msra.mxu0 0.0
  %885 = vmatprep.subr.mxu0 0.0
  %886 = vmatpush1.msra.mxu0 0.0
  %887 = vmatprep.mubr.f32.mxu0 0.0
  %888 = vmatmul.mubr.f32.gmra.mrb[0].mxu0 %v821
  %v889 = vpop.f32.mrb[0].mxu0
  %v890 = vadd.f32 %v817, %v889
  %v891 = vpop.f32.mrb[0].mxu0
  %892 = vdwg.mxu0
  %v893 = vld [vmem:[%s8] sm:$0xff]
  %v894 = vld [vmem:[%s8 + $0x8] sm:$0xff]
  %v895 = vld [vmem:[%s8 + $0x10] sm:$0xff]
  %v896 = vld [vmem:[%s8 + $0x18] sm:$0xff]
  %v897 = vld [vmem:[%s10] sm:$0x1]
  %v899 = vlaneseq
  %v900 = vshrl.u32 %v899, 7
  %v901 = vsub.s32 0, %v900
  %v902 = vrot.slane %v897, %v901
  %904 = vmatprep.subr.mxu0 0.0
  %905 = vmatpush1.msra.mxu0 %v893
  %906 = vmatprep.subr.mxu0 0.0
  %907 = vmatpush1.msra.mxu0 %v894
  %908 = vmatprep.subr.mxu0 0.0
  %909 = vmatpush1.msra.mxu0 %v895
  %910 = vmatprep.subr.mxu0 0.0
  %911 = vmatpush1.msra.mxu0 %v896
  %912 = vmatprep.subr.mxu0 0.0
  %913 = vmatpush1.msra.mxu0 0.0
  %914 = vmatprep.subr.mxu0 0.0
  %915 = vmatpush1.msra.mxu0 0.0
  %916 = vmatprep.subr.mxu0 0.0
  %917 = vmatpush1.msra.mxu0 0.0
  %918 = vmatprep.subr.mxu0 0.0
  %919 = vmatpush1.msra.mxu0 0.0
  %920 = vmatprep.subr.mxu0 0.0
  %921 = vmatpush1.msra.mxu0 0.0
  %922 = vmatprep.subr.mxu0 0.0
  %923 = vmatpush1.msra.mxu0 0.0
  %924 = vmatprep.subr.mxu0 0.0
  %925 = vmatpush1.msra.mxu0 0.0
  %926 = vmatprep.subr.mxu0 0.0
  %927 = vmatpush1.msra.mxu0 0.0
  %928 = vmatprep.subr.mxu0 0.0
  %929 = vmatpush1.msra.mxu0 0.0
  %930 = vmatprep.subr.mxu0 0.0
  %931 = vmatpush1.msra.mxu0 0.0
  %932 = vmatprep.subr.mxu0 0.0
  %933 = vmatpush1.msra.mxu0 0.0
  %934 = vmatprep.subr.mxu0 0.0
  %935 = vmatpush1.msra.mxu0 0.0
  %936 = vmatprep.subr.mxu0 0.0
  %937 = vmatpush1.msra.mxu0 0.0
  %938 = vmatprep.subr.mxu0 0.0
  %939 = vmatpush1.msra.mxu0 0.0
  %940 = vmatprep.subr.mxu0 0.0
  %941 = vmatpush1.msra.mxu0 0.0
  %942 = vmatprep.subr.mxu0 0.0
  %943 = vmatpush1.msra.mxu0 0.0
  %944 = vmatprep.subr.mxu0 0.0
  %945 = vmatpush1.msra.mxu0 0.0
  %946 = vmatprep.subr.mxu0 0.0
  %947 = vmatpush1.msra.mxu0 0.0
  %948 = vmatprep.subr.mxu0 0.0
  %949 = vmatpush1.msra.mxu0 0.0
  %950 = vmatprep.subr.mxu0 0.0
  %951 = vmatpush1.msra.mxu0 0.0
  %952 = vmatprep.subr.mxu0 0.0
  %953 = vmatpush1.msra.mxu0 0.0
  %954 = vmatprep.subr.mxu0 0.0
  %955 = vmatpush1.msra.mxu0 0.0
  %956 = vmatprep.subr.mxu0 0.0
  %957 = vmatpush1.msra.mxu0 0.0
  %958 = vmatprep.subr.mxu0 0.0
  %959 = vmatpush1.msra.mxu0 0.0
  %960 = vmatprep.subr.mxu0 0.0
  %961 = vmatpush1.msra.mxu0 0.0
  %962 = vmatprep.subr.mxu0 0.0
  %963 = vmatpush1.msra.mxu0 0.0
  %964 = vmatprep.subr.mxu0 0.0
  %965 = vmatpush1.msra.mxu0 0.0
  %966 = vmatprep.subr.mxu0 0.0
  %967 = vmatpush1.msra.mxu0 0.0
  %968 = vmatprep.mubr.f32.mxu0 0.0
  %969 = vmatmul.mubr.f32.gmra.mrb[0].mxu0 %v189
  %v970 = vpop.f32.mrb[0].mxu0
  %v971 = vadd.f32 %v902, %v970
  %v972 = vpop.f32.mrb[0].mxu0
  %973 = vdwg.mxu0
  %v974 = vadd.f32 %v890, %v971
  %v975 = vxor.u32 %v974, 2147483648
  %v976 = vmul.f32 %v975, 1.442695
  %v977 = vpow.pop %v976
  %v978 = vadd.f32 %v977, 1.0
  %v979 = vrcp.pop %v978
  %v980 = vmul.f32 1.0, %v979
  %982 = vrot.lane.b32.xlu0 %v971, 64
  %v983 = vpop.permute.xlu0 %982
  %v985 = vmul.f32 %v980, %v983
  %987 = vrot.lane.b32.xlu0 %v985, 64
  %v988 = vpop.permute.xlu0 %987
  %v990 = vadd.f32 %v890, %v988
  %v991 = vtanh.pop %v990
  %v992 = vsub.f32 1.0, %v980
  %994 = vrot.lane.b32.xlu0 %v991, 96
  %v995 = vpop.permute.xlu0 %994
  %v997 = vmul.f32 %v992, %v995
  %998 = vrot.lane.b32.xlu0 %v41, 32
  %v999 = vpop.permute.xlu0 %998
  %v1001 = vmul.f32 %v980, %v999
  %v1002 = vadd.f32 %v997, %v1001
  %1004 = vrot.lane.b32.xlu0 %v1002, 96
  %v1005 = vpop.permute.xlu0 %1004
  %1007 = vst.msk [vmem:[%s12] sm:$0xff] %vm54, %v1005
  %1008 = vrot.lane.b32.xlu0 %v797, 32
  %v1009 = vpop.permute.xlu0 %1008
  %1011 = vrot.lane.b32.xlu0 %v1002, 32
  %v1012 = vpop.permute.xlu0 %1011
  %v1014 = vsel %vm54, %v40, %v1009
  %v1015 = vsel %vm819, %v1014, %v1012
  %vm1016 = vcmask 785408
  %1017 = vst.msk [vmem:[%s11] sm:$0xff] %vm1016, %v1015
  // Predicated region
  $region46: #{_lambda_.2} parent=0 // pred_check
    _
  $region47: #{_lambda_.2} parent=0 // pred_check_branch
    %1019 = sbr.rel (0) target = $region49
  $region48: #{_lambda_.2} parent=0 // pred_region
    _
  $region49: #{_lambda_.2} parent=0 // pred_fallthru
    _
  // Predicated region
  $region50: #{_lambda_.2} parent=0 // pred_check
    _
  $region51: #{_lambda_.2} parent=0 // pred_check_branch
    %1021 = sbr.rel (0) target = $region53
  $region52: #{_lambda_.2} parent=0 // pred_region
    _
  $region53: #{_lambda_.2} parent=0 // pred_fallthru
    _
  // Predicated region
  $region54: #{_lambda_.2} parent=0 // pred_check
    _
  $region55: #{_lambda_.2} parent=0 // pred_check_branch
    %1023 = sbr.rel (0) target = $region57
  $region56: #{_lambda_.2} parent=0 // pred_region
    _
  $region57: #{_lambda_.2} parent=0 // pred_fallthru
    _
  // Predicated region
  $region58: #{_lambda_.2} parent=0 // pred_check
    _
  $region59: #{_lambda_.2} parent=0 // pred_check_branch
    %1025 = sbr.rel (0) target = $region61
  $region60: #{_lambda_.2} parent=0 // pred_region
    _
  $region61: #{_lambda_.2} parent=0 // pred_fallthru
    _

</llo_original>
